<compile_context>
chip_gen: v6e
topology: v6e:2x2x1
jax: 0.10.0
libtpu: 0.0.40
codegen_flags: <defaults>
</compile_context>

<pallas_src>
import functools

import jax
import jax.numpy as jnp
from jax import lax
from jax.experimental import pallas as pl
from jax.experimental.pallas import tpu as pltpu

_LANES = 128


def _round_up(x, m):
    return ((x + m - 1) // m) * m


def _blur_field_loss_kernel(pred_ref, targ_ref, out_ref, acc_ref,
                            *, eps, hw, s_rows, padded):
    t_idx = pl.program_id(1)

    @pl.when(t_idx == 0)
    def _init():
        acc_ref[...] = jnp.zeros_like(acc_ref)

    p = pred_ref[...].astype(jnp.float32)   # (1, 3, S, 128)
    t = targ_ref[...].astype(jnp.float32)   # (1, 3, S, 128)

    pbx, pby, pmag = p[0, 0], p[0, 1], p[0, 2]   # each (S, 128)
    tbx, tby, tmag = t[0, 0], t[0, 1], t[0, 2]

    # --- Charbonnier per channel (channel 2 doubles as the magnitude term) ---
    dbx = pbx - tbx
    dby = pby - tby
    dmag = pmag - tmag
    cbx = jnp.sqrt(dbx * dbx + eps)
    cby = jnp.sqrt(dby * dby + eps)
    cmag = jnp.sqrt(dmag * dmag + eps)
    charb_total = cbx + cby + cmag            # sum over the 3 channels

    # --- Direction: 1 - cosine similarity, one reciprocal instead of 4 divides ---
    pred_norm = jnp.sqrt(pbx * pbx + pby * pby) + jnp.float32(1e-8)
    targ_norm = jnp.sqrt(tbx * tbx + tby * tby) + jnp.float32(1e-8)
    cos_sim = (pbx * tbx + pby * tby) * pl.reciprocal(pred_norm * targ_norm,
                                                      approx=False)
    one_minus = jnp.float32(1.0) - cos_sim

    if padded:
        row = lax.broadcasted_iota(jnp.int32, (s_rows, _LANES), 0)
        lane = lax.broadcasted_iota(jnp.int32, (s_rows, _LANES), 1)
        gidx = (t_idx * s_rows + row) * _LANES + lane
        mask = gidx < hw
        zero = jnp.float32(0.0)
        charb_total = jnp.where(mask, charb_total, zero)
        cmag = jnp.where(mask, cmag, zero)
        one_minus = jnp.where(mask, one_minus, zero)

    # Per-lane/per-sublane accumulation (pure VPU work, no cross-lane reduce).
    acc_ref[0] = acc_ref[0] + charb_total
    acc_ref[1] = acc_ref[1] + cmag
    acc_ref[2] = acc_ref[2] + one_minus

    @pl.when(t_idx == pl.num_programs(1) - 1)
    def _finalize():
        a = acc_ref[...]
        l1_b = jnp.sum(a[0])     # Charbonnier sum over all channels
        mag_b = jnp.sum(a[1])    # Charbonnier sum over magnitude channel
        dir_b = jnp.sum(a[2])    # sum of (1 - cos_sim)
        sub = lax.broadcasted_iota(jnp.int32, (8, _LANES), 0)
        lane = lax.broadcasted_iota(jnp.int32, (8, _LANES), 1)
        blk = jnp.where((sub == 0) & (lane == 0), l1_b,
              jnp.where((sub == 0) & (lane == 1), dir_b,
              jnp.where((sub == 0) & (lane == 2), mag_b, jnp.float32(0.0))))
        out_ref[0] = blk


def blur_field_loss(pred, target, *, lambda_dir=0.5, lambda_mag=0.5, eps=1e-6,
                    tile_rows=1024):
    """Pallas TPU implementation of BlurFieldLoss.forward. Returns a scalar."""
    assert pred.shape == target.shape
    B, C, H, W = pred.shape
    assert C == 3, "BlurFieldLoss expects 3 channels (bx, by, mag)"

    HW = H * W
    R = pl.cdiv(HW, _LANES)                   # rows of 128 lanes
    S = min(int(tile_rows), _round_up(R, 8))  # tile rows (multiple of 8)
    S = _round_up(S, 8)
    R_pad = _round_up(R, S)
    HW_pad = R_pad * _LANES
    num_tiles = R_pad // S
    padded = HW_pad != HW

    def prep(x):
        xf = x.reshape(B, C, HW)
        if padded:
            xf = jnp.pad(xf, ((0, 0), (0, 0), (0, HW_pad - HW)))
        return xf.reshape(B, C, R_pad, _LANES)

    pred_r = prep(pred)
    targ_r = prep(target)

    kernel = functools.partial(
        _blur_field_loss_kernel,
        eps=float(eps), hw=HW, s_rows=S, padded=padded,
    )

    out = pl.pallas_call(
        kernel,
        out_shape=jax.ShapeDtypeStruct((B, 8, _LANES), jnp.float32),
        grid_spec=pltpu.PrefetchScalarGridSpec(
            num_scalar_prefetch=0,
            grid=(B, num_tiles),
            in_specs=[
                pl.BlockSpec((1, C, S, _LANES), lambda b, t: (b, 0, t, 0)),
                pl.BlockSpec((1, C, S, _LANES), lambda b, t: (b, 0, t, 0)),
            ],
            out_specs=pl.BlockSpec((1, 8, _LANES), lambda b, t: (b, 0, 0)),
            scratch_shapes=[pltpu.VMEM((3, S, _LANES), jnp.float32)],
        ),
        compiler_params=pltpu.CompilerParams(
            dimension_semantics=("parallel", "arbitrary"),
        ),
    )(pred_r, targ_r)

    # Tiny epilogue in plain JAX: combine per-batch partial sums.
    partials = out[:, 0, :3]                          # (B, 3)
    n_all = float(B * C * HW)
    n_pix = float(B * HW)
    l1_loss = jnp.sum(partials[:, 0]) / n_all
    dir_loss = jnp.sum(partials[:, 1]) / n_pix
    mag_loss = jnp.sum(partials[:, 2]) / n_pix
    return l1_loss + lambda_dir * dir_loss + lambda_mag * mag_loss


def blur_field_loss_ref(pred, target, *, lambda_dir=0.5, lambda_mag=0.5, eps=1e-6):
    """Pure-JAX reference mirroring the PyTorch module exactly."""
    diff = pred - target
    l1_loss = jnp.mean(jnp.sqrt(diff * diff + eps))

    pred_vec = pred[:, 0:2]
    targ_vec = target[:, 0:2]
    pred_norm = jnp.sqrt(jnp.sum(pred_vec * pred_vec, axis=1, keepdims=True)) + 1e-8
    targ_norm = jnp.sqrt(jnp.sum(targ_vec * targ_vec, axis=1, keepdims=True)) + 1e-8
    cos_sim = jnp.sum((pred_vec / pred_norm) * (targ_vec / targ_norm),
                      axis=1, keepdims=True)
    dir_loss = jnp.mean(1.0 - cos_sim)

    dmag = pred[:, 2:3] - target[:, 2:3]
    mag_loss = jnp.mean(jnp.sqrt(dmag * dmag + eps))

    return l1_loss + lambda_dir * dir_loss + lambda_mag * mag_loss


if __name__ == "__main__":
    key = jax.random.PRNGKey(0)
    k1, k2 = jax.random.split(key)
    B, C, H, W = 2, 3, 16, 16
    pred = jax.random.normal(k1, (B, C, H, W), dtype=jnp.float32)
    target = jax.random.normal(k2, (B, C, H, W), dtype=jnp.float32)

    loss = blur_field_loss(pred, target)
    loss = jax.block_until_ready(loss)

    ref = blur_field_loss_ref(pred, target)
    assert jnp.allclose(loss, ref, rtol=1e-5, atol=1e-5), (loss, ref)

    print("KERNEL_OK")
</pallas_src>

<mosaic_0001>
module attributes {stable_mosaic.version = 11 : i64} {
  func.func @_blur_field_loss_kernel(%arg0: i32, %arg1: i32, %arg2: memref<1x3x8x128xf32, #tpu.memory_space<vmem>>, %arg3: memref<1x3x8x128xf32, #tpu.memory_space<vmem>>, %arg4: memref<1x8x128xf32, #tpu.memory_space<vmem>>, %arg5: memref<3x8x128xf32, #tpu.memory_space<vmem>>) attributes {dimension_semantics = [#tpu.dimension_semantics<parallel>, #tpu.dimension_semantics<arbitrary>], iteration_bounds = array<i64: 2, 1>, scalar_prefetch = 0 : i64, scratch_operands = 1 : i64, tpu.core_type = #tpu.core_type<tc>, window_params = [{transform_indices = @transform_0, window_bounds = array<i64: 1, 3, 8, 128>}, {transform_indices = @transform_1, window_bounds = array<i64: 1, 3, 8, 128>}, {transform_indices = @transform_2, window_bounds = array<i64: 1, 8, 128>}]} {
    %c0_i32 = arith.constant 0 : i32
    %0 = arith.cmpi eq, %arg1, %c0_i32 : i32
    %1 = arith.extui %0 : i1 to i32
    %c0_i32_0 = arith.constant 0 : i32
    %2 = arith.cmpi ne, %1, %c0_i32_0 : i32
    scf.if %2 {
      %cst_34 = arith.constant 0.000000e+00 : f32
      %91 = vector.broadcast %cst_34 : f32 to vector<3x8x128xf32>
      %c0_35 = arith.constant 0 : index
      %c0_36 = arith.constant 0 : index
      %c0_37 = arith.constant 0 : index
      %92 = vector.load %arg5[%c0_35, %c0_36, %c0_37] : memref<3x8x128xf32, #tpu.memory_space<vmem>>, vector<3x8x128xf32>
      tpu.vector_store %arg5[%c0_35, %c0_36, %c0_37], %91 {strides = array<i32>} : memref<3x8x128xf32, #tpu.memory_space<vmem>>, vector<3x8x128xf32>,
    } else {
    }
    %c0 = arith.constant 0 : index
    %c0_1 = arith.constant 0 : index
    %c0_2 = arith.constant 0 : index
    %c0_3 = arith.constant 0 : index
    %3 = vector.load %arg2[%c0, %c0_1, %c0_2, %c0_3] : memref<1x3x8x128xf32, #tpu.memory_space<vmem>>, vector<1x3x8x128xf32>
    %c0_4 = arith.constant 0 : index
    %c0_5 = arith.constant 0 : index
    %c0_6 = arith.constant 0 : index
    %c0_7 = arith.constant 0 : index
    %4 = vector.load %arg3[%c0_4, %c0_5, %c0_6, %c0_7] : memref<1x3x8x128xf32, #tpu.memory_space<vmem>>, vector<1x3x8x128xf32>
    %5 = vector.extract_strided_slice %3 {offsets = [0, 0, 0, 0], sizes = [1, 1, 8, 128], strides = [1, 1, 1, 1]} : vector<1x3x8x128xf32> to vector<1x1x8x128xf32>
    %6 = vector.shape_cast %5 : vector<1x1x8x128xf32> to vector<8x128xf32>
    %7 = vector.extract_strided_slice %3 {offsets = [0, 1, 0, 0], sizes = [1, 1, 8, 128], strides = [1, 1, 1, 1]} : vector<1x3x8x128xf32> to vector<1x1x8x128xf32>
    %8 = vector.shape_cast %7 : vector<1x1x8x128xf32> to vector<8x128xf32>
    %9 = vector.extract_strided_slice %3 {offsets = [0, 2, 0, 0], sizes = [1, 1, 8, 128], strides = [1, 1, 1, 1]} : vector<1x3x8x128xf32> to vector<1x1x8x128xf32>
    %10 = vector.shape_cast %9 : vector<1x1x8x128xf32> to vector<8x128xf32>
    %11 = vector.extract_strided_slice %4 {offsets = [0, 0, 0, 0], sizes = [1, 1, 8, 128], strides = [1, 1, 1, 1]} : vector<1x3x8x128xf32> to vector<1x1x8x128xf32>
    %12 = vector.shape_cast %11 : vector<1x1x8x128xf32> to vector<8x128xf32>
    %13 = vector.extract_strided_slice %4 {offsets = [0, 1, 0, 0], sizes = [1, 1, 8, 128], strides = [1, 1, 1, 1]} : vector<1x3x8x128xf32> to vector<1x1x8x128xf32>
    %14 = vector.shape_cast %13 : vector<1x1x8x128xf32> to vector<8x128xf32>
    %15 = vector.extract_strided_slice %4 {offsets = [0, 2, 0, 0], sizes = [1, 1, 8, 128], strides = [1, 1, 1, 1]} : vector<1x3x8x128xf32> to vector<1x1x8x128xf32>
    %16 = vector.shape_cast %15 : vector<1x1x8x128xf32> to vector<8x128xf32>
    %17 = arith.subf %6, %12 : vector<8x128xf32>
    %18 = arith.subf %8, %14 : vector<8x128xf32>
    %19 = arith.subf %10, %16 : vector<8x128xf32>
    %20 = arith.mulf %17, %17 : vector<8x128xf32>
    %cst = arith.constant 9.99999997E-7 : f32
    %21 = vector.broadcast %cst : f32 to vector<8x128xf32>
    %22 = arith.addf %20, %21 : vector<8x128xf32>
    %23 = math.sqrt %22 : vector<8x128xf32>
    %24 = arith.mulf %18, %18 : vector<8x128xf32>
    %cst_8 = arith.constant 9.99999997E-7 : f32
    %25 = vector.broadcast %cst_8 : f32 to vector<8x128xf32>
    %26 = arith.addf %24, %25 : vector<8x128xf32>
    %27 = math.sqrt %26 : vector<8x128xf32>
    %28 = arith.mulf %19, %19 : vector<8x128xf32>
    %cst_9 = arith.constant 9.99999997E-7 : f32
    %29 = vector.broadcast %cst_9 : f32 to vector<8x128xf32>
    %30 = arith.addf %28, %29 : vector<8x128xf32>
    %31 = math.sqrt %30 : vector<8x128xf32>
    %32 = arith.addf %23, %27 : vector<8x128xf32>
    %33 = arith.addf %32, %31 : vector<8x128xf32>
    %34 = arith.mulf %6, %6 : vector<8x128xf32>
    %35 = arith.mulf %8, %8 : vector<8x128xf32>
    %36 = arith.addf %34, %35 : vector<8x128xf32>
    %37 = math.sqrt %36 : vector<8x128xf32>
    %cst_10 = arith.constant 9.99999993E-9 : f32
    %38 = vector.broadcast %cst_10 : f32 to vector<8x128xf32>
    %39 = arith.addf %37, %38 : vector<8x128xf32>
    %40 = arith.mulf %12, %12 : vector<8x128xf32>
    %41 = arith.mulf %14, %14 : vector<8x128xf32>
    %42 = arith.addf %40, %41 : vector<8x128xf32>
    %43 = math.sqrt %42 : vector<8x128xf32>
    %cst_11 = arith.constant 9.99999993E-9 : f32
    %44 = vector.broadcast %cst_11 : f32 to vector<8x128xf32>
    %45 = arith.addf %43, %44 : vector<8x128xf32>
    %46 = arith.mulf %6, %12 : vector<8x128xf32>
    %47 = arith.mulf %8, %14 : vector<8x128xf32>
    %48 = arith.addf %46, %47 : vector<8x128xf32>
    %49 = arith.mulf %39, %45 : vector<8x128xf32>
    %50 = tpu.reciprocal %49 : vector<8x128xf32> -> vector<8x128xf32>
    %51 = arith.mulf %48, %50 : vector<8x128xf32>
    %cst_12 = arith.constant 1.000000e+00 : f32
    %52 = vector.broadcast %cst_12 : f32 to vector<8x128xf32>
    %53 = arith.subf %52, %51 : vector<8x128xf32>
    %54 = tpu.iota {dimensions = array<i32: 0>} : vector<8x128xi32>
    %55 = tpu.iota {dimensions = array<i32: 1>} : vector<8x128xi32>
    %c8_i32 = arith.constant 8 : i32
    %56 = arith.muli %arg1, %c8_i32 : i32
    %57 = vector.broadcast %56 : i32 to vector<8x128xi32>
    %58 = arith.addi %57, %54 : vector<8x128xi32>
    %c128_i32 = arith.constant 128 : i32
    %59 = vector.broadcast %c128_i32 : i32 to vector<8x128xi32>
    %60 = arith.muli %58, %59 : vector<8x128xi32>
    %61 = arith.addi %60, %55 : vector<8x128xi32>
    %c256_i32 = arith.constant 256 : i32
    %62 = vector.broadcast %c256_i32 : i32 to vector<8x128xi32>
    %63 = arith.cmpi slt, %61, %62 : vector<8x128xi32>
    %cst_13 = arith.constant 0.000000e+00 : f32
    %64 = vector.broadcast %cst_13 : f32 to vector<8x128xf32>
    %65 = arith.select %63, %33, %64 : vector<8x128xi1>, vector<8x128xf32>
    %cst_14 = arith.constant 0.000000e+00 : f32
    %66 = vector.broadcast %cst_14 : f32 to vector<8x128xf32>
    %67 = arith.select %63, %31, %66 : vector<8x128xi1>, vector<8x128xf32>
    %cst_15 = arith.constant 0.000000e+00 : f32
    %68 = vector.broadcast %cst_15 : f32 to vector<8x128xf32>
    %69 = arith.select %63, %53, %68 : vector<8x128xi1>, vector<8x128xf32>
    %c0_16 = arith.constant 0 : index
    %c0_17 = arith.constant 0 : index
    %c0_18 = arith.constant 0 : index
    %70 = vector.load %arg5[%c0_16, %c0_17, %c0_18] : memref<3x8x128xf32, #tpu.memory_space<vmem>>, vector<1x8x128xf32>
    %71 = vector.shape_cast %70 : vector<1x8x128xf32> to vector<8x128xf32>
    %72 = arith.addf %71, %65 : vector<8x128xf32>
    %c0_19 = arith.constant 0 : index
    %c0_20 = arith.constant 0 : index
    %c0_21 = arith.constant 0 : index
    %73 = vector.load %arg5[%c0_19, %c0_20, %c0_21] : memref<3x8x128xf32, #tpu.memory_space<vmem>>, vector<1x8x128xf32>
    %74 = vector.shape_cast %73 : vector<1x8x128xf32> to vector<8x128xf32>
    %75 = vector.shape_cast %72 : vector<8x128xf32> to vector<1x8x128xf32>
    tpu.vector_store %arg5[%c0_19, %c0_20, %c0_21], %75 {strides = array<i32>} : memref<3x8x128xf32, #tpu.memory_space<vmem>>, vector<1x8x128xf32>,
    %c1 = arith.constant 1 : index
    %c0_22 = arith.constant 0 : index
    %c0_23 = arith.constant 0 : index
    %76 = vector.load %arg5[%c1, %c0_22, %c0_23] : memref<3x8x128xf32, #tpu.memory_space<vmem>>, vector<1x8x128xf32>
    %77 = vector.shape_cast %76 : vector<1x8x128xf32> to vector<8x128xf32>
    %78 = arith.addf %77, %67 : vector<8x128xf32>
    %c1_24 = arith.constant 1 : index
    %c0_25 = arith.constant 0 : index
    %c0_26 = arith.constant 0 : index
    %79 = vector.load %arg5[%c1_24, %c0_25, %c0_26] : memref<3x8x128xf32, #tpu.memory_space<vmem>>, vector<1x8x128xf32>
    %80 = vector.shape_cast %79 : vector<1x8x128xf32> to vector<8x128xf32>
    %81 = vector.shape_cast %78 : vector<8x128xf32> to vector<1x8x128xf32>
    tpu.vector_store %arg5[%c1_24, %c0_25, %c0_26], %81 {strides = array<i32>} : memref<3x8x128xf32, #tpu.memory_space<vmem>>, vector<1x8x128xf32>,
    %c2 = arith.constant 2 : index
    %c0_27 = arith.constant 0 : index
    %c0_28 = arith.constant 0 : index
    %82 = vector.load %arg5[%c2, %c0_27, %c0_28] : memref<3x8x128xf32, #tpu.memory_space<vmem>>, vector<1x8x128xf32>
    %83 = vector.shape_cast %82 : vector<1x8x128xf32> to vector<8x128xf32>
    %84 = arith.addf %83, %69 : vector<8x128xf32>
    %c2_29 = arith.constant 2 : index
    %c0_30 = arith.constant 0 : index
    %c0_31 = arith.constant 0 : index
    %85 = vector.load %arg5[%c2_29, %c0_30, %c0_31] : memref<3x8x128xf32, #tpu.memory_space<vmem>>, vector<1x8x128xf32>
    %86 = vector.shape_cast %85 : vector<1x8x128xf32> to vector<8x128xf32>
    %87 = vector.shape_cast %84 : vector<8x128xf32> to vector<1x8x128xf32>
    tpu.vector_store %arg5[%c2_29, %c0_30, %c0_31], %87 {strides = array<i32>} : memref<3x8x128xf32, #tpu.memory_space<vmem>>, vector<1x8x128xf32>,
    %c0_i32_32 = arith.constant 0 : i32
    %88 = arith.cmpi eq, %arg1, %c0_i32_32 : i32
    %89 = arith.extui %88 : i1 to i32
    %c0_i32_33 = arith.constant 0 : i32
    %90 = arith.cmpi ne, %89, %c0_i32_33 : i32
    scf.if %90 {
      %c0_34 = arith.constant 0 : index
      %c0_35 = arith.constant 0 : index
      %c0_36 = arith.constant 0 : index
      %91 = vector.load %arg5[%c0_34, %c0_35, %c0_36] : memref<3x8x128xf32, #tpu.memory_space<vmem>>, vector<3x8x128xf32>
      %92 = vector.extract_strided_slice %91 {offsets = [0, 0, 0], sizes = [1, 8, 128], strides = [1, 1, 1]} : vector<3x8x128xf32> to vector<1x8x128xf32>
      %93 = vector.shape_cast %92 : vector<1x8x128xf32> to vector<8x128xf32>
      %94 = vector.shape_cast %93 : vector<8x128xf32> to vector<1x8x128xf32>
      %cst_37 = arith.constant dense<0.000000e+00> : vector<1xf32>
      %95 = vector.multi_reduction <add>, %94, %cst_37 [1, 2] : vector<1x8x128xf32> to vector<1xf32>
      %96 = vector.shape_cast %95 : vector<1xf32> to vector<1x1x1xf32>
      %97 = vector.extract %96[0, 0, 0] : f32 from vector<1x1x1xf32>
      %98 = vector.extract_strided_slice %91 {offsets = [1, 0, 0], sizes = [1, 8, 128], strides = [1, 1, 1]} : vector<3x8x128xf32> to vector<1x8x128xf32>
      %99 = vector.shape_cast %98 : vector<1x8x128xf32> to vector<8x128xf32>
      %100 = vector.shape_cast %99 : vector<8x128xf32> to vector<1x8x128xf32>
      %cst_38 = arith.constant dense<0.000000e+00> : vector<1xf32>
      %101 = vector.multi_reduction <add>, %100, %cst_38 [1, 2] : vector<1x8x128xf32> to vector<1xf32>
      %102 = vector.shape_cast %101 : vector<1xf32> to vector<1x1x1xf32>
      %103 = vector.extract %102[0, 0, 0] : f32 from vector<1x1x1xf32>
      %104 = vector.extract_strided_slice %91 {offsets = [2, 0, 0], sizes = [1, 8, 128], strides = [1, 1, 1]} : vector<3x8x128xf32> to vector<1x8x128xf32>
      %105 = vector.shape_cast %104 : vector<1x8x128xf32> to vector<8x128xf32>
      %106 = vector.shape_cast %105 : vector<8x128xf32> to vector<1x8x128xf32>
      %cst_39 = arith.constant dense<0.000000e+00> : vector<1xf32>
      %107 = vector.multi_reduction <add>, %106, %cst_39 [1, 2] : vector<1x8x128xf32> to vector<1xf32>
      %108 = vector.shape_cast %107 : vector<1xf32> to vector<1x1x1xf32>
      %109 = vector.extract %108[0, 0, 0] : f32 from vector<1x1x1xf32>
      %110 = tpu.iota {dimensions = array<i32: 0>} : vector<8x128xi32>
      %111 = tpu.iota {dimensions = array<i32: 1>} : vector<8x128xi32>
      %c0_i32_40 = arith.constant 0 : i32
      %112 = vector.broadcast %c0_i32_40 : i32 to vector<8x128xi32>
      %113 = arith.cmpi eq, %110, %112 : vector<8x128xi32>
      %c0_i32_41 = arith.constant 0 : i32
      %114 = vector.broadcast %c0_i32_41 : i32 to vector<8x128xi32>
      %115 = arith.cmpi eq, %111, %114 : vector<8x128xi32>
      %116 = arith.andi %113, %115 : vector<8x128xi1>
      %c0_i32_42 = arith.constant 0 : i32
      %117 = vector.broadcast %c0_i32_42 : i32 to vector<8x128xi32>
      %118 = arith.cmpi eq, %110, %117 : vector<8x128xi32>
      %c1_i32 = arith.constant 1 : i32
      %119 = vector.broadcast %c1_i32 : i32 to vector<8x128xi32>
      %120 = arith.cmpi eq, %111, %119 : vector<8x128xi32>
      %121 = arith.andi %118, %120 : vector<8x128xi1>
      %c0_i32_43 = arith.constant 0 : i32
      %122 = vector.broadcast %c0_i32_43 : i32 to vector<8x128xi32>
      %123 = arith.cmpi eq, %110, %122 : vector<8x128xi32>
      %c2_i32 = arith.constant 2 : i32
      %124 = vector.broadcast %c2_i32 : i32 to vector<8x128xi32>
      %125 = arith.cmpi eq, %111, %124 : vector<8x128xi32>
      %126 = arith.andi %123, %125 : vector<8x128xi1>
      %cst_44 = arith.constant 0.000000e+00 : f32
      %127 = vector.broadcast %103 : f32 to vector<8x128xf32>
      %128 = vector.broadcast %cst_44 : f32 to vector<8x128xf32>
      %129 = arith.select %126, %127, %128 : vector<8x128xi1>, vector<8x128xf32>
      %130 = vector.broadcast %109 : f32 to vector<8x128xf32>
      %131 = arith.select %121, %130, %129 : vector<8x128xi1>, vector<8x128xf32>
      %132 = vector.broadcast %97 : f32 to vector<8x128xf32>
      %133 = arith.select %116, %132, %131 : vector<8x128xi1>, vector<8x128xf32>
      %c0_45 = arith.constant 0 : index
      %c0_46 = arith.constant 0 : index
      %c0_47 = arith.constant 0 : index
      %134 = vector.load %arg4[%c0_45, %c0_46, %c0_47] : memref<1x8x128xf32, #tpu.memory_space<vmem>>, vector<1x8x128xf32>
      %135 = vector.shape_cast %134 : vector<1x8x128xf32> to vector<8x128xf32>
      %136 = vector.shape_cast %133 : vector<8x128xf32> to vector<1x8x128xf32>
      tpu.vector_store %arg4[%c0_45, %c0_46, %c0_47], %136 {strides = array<i32>} : memref<1x8x128xf32, #tpu.memory_space<vmem>>, vector<1x8x128xf32>,
    } else {
    }
    return
  }
  func.func @transform_0(%arg0: i32, %arg1: i32) -> (i32, i32, i32, i32) {
    %c0_i32 = arith.constant 0 : i32
    %c0_i32_0 = arith.constant 0 : i32
    %c0_i32_1 = arith.constant 0 : i32
    return %arg0, %c0_i32, %arg1, %c0_i32_0 : i32, i32, i32, i32
  }
  func.func @transform_1(%arg0: i32, %arg1: i32) -> (i32, i32, i32, i32) {
    %c0_i32 = arith.constant 0 : i32
    %c0_i32_0 = arith.constant 0 : i32
    %c0_i32_1 = arith.constant 0 : i32
    return %arg0, %c0_i32, %arg1, %c0_i32_0 : i32, i32, i32, i32
  }
  func.func @transform_2(%arg0: i32, %arg1: i32) -> (i32, i32, i32) {
    %c0_i32 = arith.constant 0 : i32
    %c0_i32_0 = arith.constant 0 : i32
    %c0_i32_1 = arith.constant 0 : i32
    return %arg0, %c0_i32, %c0_i32_0 : i32, i32, i32
  }
}

</mosaic_0001>

<llo_original>
// kernel: tpu_custom_call.1
$region0: #{tpu_custom_call.1}
  #allocation0 [shape = 'u32[]', space=smem, size = 0x4, offset = 0x4, fixed_abs, tag = 'smem constant byte address 0x4 - core index']
  #allocation1 [shape = 'u32[144,128]{1,0:T(1,128)}', space=vmem, size = 0x12000, scoped, tag = 'internal scratch']
  #allocation2 [shape = 'f32[3,8,128]{2,1,0:T(8,128)}', space=vmem, size = 0x3000, scoped, tag = 'scratch operand']
  %s0 = inlined_call_operand.hbm [shape: f32[2,3,8,128], index: 0, kind: input, shape index: {}]
  %s1 = inlined_call_operand.hbm [shape: f32[2,3,8,128], index: 1, kind: input, shape index: {}]
  %s2 = inlined_call_operand.hbm [shape: f32[2,8,128], index: 2, kind: output, shape index: {}]
  %s3 = sld [smem:[#allocation0]]
  $region57: #{tpu_custom_call.1} parent=0
    _
  %s5 = ssub.s32 1, %s3
  %s6 = scalar_select 0, %s5, %s3
  $region1: #{tpu_custom_call.1} parent=0
    #allocation3 [shape = 'u8[24576]{0}', space=vmem, size = 0x6000, scoped, tag = 'input window, operand 0']
    #allocation4 [shape = 's32[2]{0}', space=sflag, size = 0x8, scoped, tag = 'scoped memory for tpu_custom_call.1']
    #allocation5 [shape = 's32[2]{0}', space=sflag, size = 0x8, scoped, tag = 'scoped memory for tpu_custom_call.1']
    #allocation6 [shape = 'u8[24576]{0}', space=vmem, size = 0x6000, scoped, tag = 'input window, operand 1']
    #allocation7 [shape = 's32[2]{0}', space=sflag, size = 0x8, scoped, tag = 'scoped memory for tpu_custom_call.1']
    #allocation8 [shape = 'u8[8192]{0}', space=vmem, size = 0x2000, scoped, tag = 'output window, operand 0']
    %7 = vsyncpa [#allocation4], 0
    %s8 = scalar_lea.sflag [#allocation4], 1
    %9 = vsyncpa %s8, 0
    %10 = vsyncpa [#allocation7], 0
    %s11 = scalar_lea.sflag [#allocation7], 1
    %12 = vsyncpa %s11, 0
    %13 = vsyncpa [#allocation5], 0
    %s14 = scalar_lea.sflag [#allocation5], 1
    %15 = vsyncpa %s14, 0
    loop: start=0, step=1, limit=4
    $region2: #{tpu_custom_call.1} parent=1 // loop_pre_header
      _
    $region3: #{tpu_custom_call.1} parent=1 // loop_header
      %s17 = sphi 0, %s21
      %p18 = scmp.ge.s32.totalorder %s17, 4
      %s24 = sphi 0, %s36
      %s25 = sphi 0, %s32
      %s26 = sphi 0, %s24
      %s27 = sphi 0, %s25
      %s28 = sphi 0, %s26
      %s29 = sphi 0, %s27
      %s41 = sphi 0, %s43
      %s44 = sphi 0, %s41
      %s45 = sphi 0, %s44
      %s61 = sphi 0, %s45
      %s69 = sphi 0, %s71
      %s72 = sphi 0, %s69
      %s73 = sphi 0, %s72
      %s89 = sphi 0, %s73
      %s95 = sphi 0, %s97
      %s98 = sphi 0, %s95
      %s99 = sphi 0, %s98
      %s115 = sphi 0, %s99
    $region4: #{tpu_custom_call.1} parent=1 // loop_header_branch
      %20 = sbr.rel (%p18) target = $region8
    $region5: #{tpu_custom_call.1} parent=1 // loop_body
      %s22 = ssub.s32 %s17, 1
      %s23 = ssub.s32 %s17, 2
      %s30 = sadd.s32 1, %s25
      %p31 = scmp.ge.s32.totalorder %s30, 1
      %s32 = scalar_select %p31, 0, %s30
      %s33 = sadd.s32 1, %s24
      %s34 = scalar_select %p31, %s33, %s24
      %p35 = scmp.ge.s32.totalorder %s34, 2
      %s36 = scalar_select %p35, 0, %s34
      %s37 = ssub.s32 %s24, %s36
      %s38 = ssub.s32 %s25, %s32
      %s39 = sor.u32 %s37, %s38
      %p40 = scmp.eq.s32.totalorder %s39, 0
      %s42 = sadd.s32 %s41, 1
      %s43 = scalar_select %p40, %s41, %s42
      %p46 = pneg %p40
      %p47 = scmp.eq.s32.totalorder %s17, 1
      %p48 = por %p46, %p47
      %p49 = scmp.ne.s32.totalorder %s41, %s44
      %p50 = scmp.eq.s32.totalorder %s17, 0
      %p51 = por %p49, %p50
      %p52 = scmp.ne.s32.totalorder %s41, %s44
      %p53 = scmp.eq.s32.totalorder %s22, 1
      %p54 = por %p52, %p53
      %p55 = scmp.ne.s32.totalorder %s44, %s45
      %p56 = scmp.eq.s32.totalorder %s22, 0
      %p57 = por %p55, %p56
      %p58 = scmp.ne.s32.totalorder %s44, %s45
      %p59 = scmp.eq.s32.totalorder %s23, 1
      %p60 = por %p58, %p59
      %p62 = scmp.ne.s32.totalorder %s45, %s61
      %p63 = scmp.eq.s32.totalorder %s23, 0
      %p64 = por %p62, %p63
      %s65 = ssub.s32 %s24, %s36
      %s66 = ssub.s32 %s25, %s32
      %s67 = sor.u32 %s65, %s66
      %p68 = scmp.eq.s32.totalorder %s67, 0
      %s70 = sadd.s32 %s69, 1
      %s71 = scalar_select %p68, %s69, %s70
      %p74 = pneg %p68
      %p75 = scmp.eq.s32.totalorder %s17, 1
      %p76 = por %p74, %p75
      %p77 = scmp.ne.s32.totalorder %s69, %s72
      %p78 = scmp.eq.s32.totalorder %s17, 0
      %p79 = por %p77, %p78
      %p80 = scmp.ne.s32.totalorder %s69, %s72
      %p81 = scmp.eq.s32.totalorder %s22, 1
      %p82 = por %p80, %p81
      %p83 = scmp.ne.s32.totalorder %s72, %s73
      %p84 = scmp.eq.s32.totalorder %s22, 0
      %p85 = por %p83, %p84
      %p86 = scmp.ne.s32.totalorder %s72, %s73
      %p87 = scmp.eq.s32.totalorder %s23, 1
      %p88 = por %p86, %p87
      %p90 = scmp.ne.s32.totalorder %s73, %s89
      %p91 = scmp.eq.s32.totalorder %s23, 0
      %p92 = por %p90, %p91
      %s93 = ssub.s32 %s24, %s36
      %p94 = scmp.eq.s32.totalorder %s93, 0
      %s96 = sadd.s32 %s95, 1
      %s97 = scalar_select %p94, %s95, %s96
      %p100 = pneg %p94
      %p101 = scmp.eq.s32.totalorder %s17, 1
      %p102 = por %p100, %p101
      %p103 = scmp.ne.s32.totalorder %s95, %s98
      %p104 = scmp.eq.s32.totalorder %s17, 0
      %p105 = por %p103, %p104
      %p106 = scmp.ne.s32.totalorder %s95, %s98
      %p107 = scmp.eq.s32.totalorder %s22, 1
      %p108 = por %p106, %p107
      %p109 = scmp.ne.s32.totalorder %s98, %s99
      %p110 = scmp.eq.s32.totalorder %s22, 0
      %p111 = por %p109, %p110
      %p112 = scmp.ne.s32.totalorder %s98, %s99
      %p113 = scmp.eq.s32.totalorder %s23, 1
      %p114 = por %p112, %p113
      %p116 = scmp.ne.s32.totalorder %s99, %s115
      %p117 = scmp.eq.s32.totalorder %s23, 0
      %p118 = por %p116, %p117
      %p119 = scmp.le.s32.totalorder 1, %s17
      %p120 = scmp.lt.s32.totalorder %s17, 3
      %p121 = pnand %p119, %p120
      %p122 = pneg %p121
      // Predicated region
      $region9: #{tpu_custom_call.1} parent=5 // pred_check
        _
      $region10: #{tpu_custom_call.1} parent=5 // pred_check_branch
        %124 = sbr.rel (%p121) target = $region12
      $region11: #{tpu_custom_call.1} parent=5 // pred_region
        %s125 = ssub.s32 %s17, 1
      $region12: #{tpu_custom_call.1} parent=5 // pred_fallthru
        _
      %p126 = scmp.lt.s32.totalorder %s17, 2
      // Predicated region
      $region13: #{tpu_custom_call.1} parent=5 // pred_check
        %p127 = pneg %p126
      $region14: #{tpu_custom_call.1} parent=5 // pred_check_branch
        %129 = sbr.rel (%p127) target = $region16
      $region15: #{tpu_custom_call.1} parent=5 // pred_region
        // Predicated region
        $region17: #{tpu_custom_call.1} parent=15 // pred_check
          %p130 = pneg %p51
        $region18: #{tpu_custom_call.1} parent=15 // pred_check_branch
          %132 = sbr.rel (%p130) target = $region20
        $region19: #{tpu_custom_call.1} parent=15 // pred_region
          %s133 = sand.u32 %s41, 1
          %s134 = scalar_lea.sflag [#allocation4], %s133
          %s135 = sand.u32 %s41, 1
          %s136 = smul.addr %s135, 24
          %s137 = scalar_lea.vmem [#allocation3], %s136
          %s139 = ssub.s32 384, 384
          %140 = vsyncadd %s134, %s139
          %s141 = smul.addr %s24, 3
          %s142 = sadd.s32 %s25, %s141
          %s143 = smul.addr %s142, 128
          %s144 = scalar_lea.hbm %s0, %s143
          %s145 = sshll.u32 %s137, 4
          %s146 = int_to_ptr.vmem [resolvable:$true] %s145
          %151 = dma.hbm_to_vmem [thread:$0]  %s144, 384, %s146, %s134, 128, 128, 8
        $region20: #{tpu_custom_call.1} parent=15 // pred_fallthru
          _
        // Predicated region
        $region21: #{tpu_custom_call.1} parent=15 // pred_check
          %p152 = pneg %p79
        $region22: #{tpu_custom_call.1} parent=15 // pred_check_branch
          %154 = sbr.rel (%p152) target = $region24
        $region23: #{tpu_custom_call.1} parent=15 // pred_region
          %s155 = sand.u32 %s69, 1
          %s156 = scalar_lea.sflag [#allocation7], %s155
          %s157 = sand.u32 %s69, 1
          %s158 = smul.addr %s157, 24
          %s159 = scalar_lea.vmem [#allocation6], %s158
          %s161 = ssub.s32 384, 384
          %162 = vsyncadd %s156, %s161
          %s163 = smul.addr %s24, 3
          %s164 = sadd.s32 %s25, %s163
          %s165 = smul.addr %s164, 128
          %s166 = scalar_lea.hbm %s1, %s165
          %s167 = sshll.u32 %s159, 4
          %s168 = int_to_ptr.vmem [resolvable:$true] %s167
          %173 = dma.hbm_to_vmem [thread:$0]  %s166, 384, %s168, %s156, 128, 128, 8
        $region24: #{tpu_custom_call.1} parent=15 // pred_fallthru
          _
      $region16: #{tpu_custom_call.1} parent=5 // pred_fallthru
        _
      %p174 = scmp.le.s32.totalorder 1, %s17
      %p175 = scmp.lt.s32.totalorder %s17, 3
      %p176 = pnand %p174, %p175
      %p177 = pneg %p176
      // Predicated region
      $region25: #{tpu_custom_call.1} parent=5 // pred_check
        _
      $region26: #{tpu_custom_call.1} parent=5 // pred_check_branch
        %179 = sbr.rel (%p176) target = $region28
      $region27: #{tpu_custom_call.1} parent=5 // pred_region
        %s180 = ssub.s32 %s17, 1
        %s181 = sand.u32 %s44, 1
        %s182 = scalar_lea.sflag [#allocation4], %s181
        %s183 = sand.u32 %s44, 1
        %s184 = smul.addr %s183, 24
        %s185 = scalar_lea.vmem [#allocation3], %s184
        // Predicated region
        $region29: #{tpu_custom_call.1} parent=27 // pred_check
          %p186 = pneg %p57
        $region30: #{tpu_custom_call.1} parent=27 // pred_check_branch
          %188 = sbr.rel (%p186) target = $region32
        $region31: #{tpu_custom_call.1} parent=27 // pred_region
          %189 = dma.done %s182, 384
        $region32: #{tpu_custom_call.1} parent=27 // pred_fallthru
          _
        %s190 = sand.u32 %s72, 1
        %s191 = scalar_lea.sflag [#allocation7], %s190
        %s192 = sand.u32 %s72, 1
        %s193 = smul.addr %s192, 24
        %s194 = scalar_lea.vmem [#allocation6], %s193
        // Predicated region
        $region33: #{tpu_custom_call.1} parent=27 // pred_check
          %p195 = pneg %p85
        $region34: #{tpu_custom_call.1} parent=27 // pred_check_branch
          %197 = sbr.rel (%p195) target = $region36
        $region35: #{tpu_custom_call.1} parent=27 // pred_region
          %198 = dma.done %s191, 384
        $region36: #{tpu_custom_call.1} parent=27 // pred_fallthru
          _
        %s199 = sand.u32 %s44, 1
        %s200 = scalar_lea.sflag [#allocation4], %s199
        %s201 = sand.u32 %s44, 1
        %s202 = smul.addr %s201, 24
        %s203 = scalar_lea.vmem [#allocation3], %s202
        %p204 = pneg %p57
        %p205 = pneg %p54
        %s206 = sand.u32 %s72, 1
        %s207 = scalar_lea.sflag [#allocation7], %s206
        %s208 = sand.u32 %s72, 1
        %s209 = smul.addr %s208, 24
        %s210 = scalar_lea.vmem [#allocation6], %s209
        %p211 = pneg %p85
        %p212 = pneg %p82
        %p213 = pneg %p111
        %p214 = pneg %p108
        %s215 = sand.u32 %s98, 1
        %s216 = scalar_lea.sflag [#allocation5], %s215
        %s217 = sand.u32 %s98, 1
        %s218 = smul.addr %s217, 8
        %s219 = scalar_lea.vmem [#allocation8], %s218
        %p220 = scmp.eq.s32.totalorder %s27, 0
        // Predicated region
        $region37: #{tpu_custom_call.1} parent=27 // pred_check
          %p221 = pneg %p220
        $region38: #{tpu_custom_call.1} parent=27 // pred_check_branch
          %223 = sbr.rel (%p221) target = $region40
        $region39: #{tpu_custom_call.1} parent=27 // pred_region
          %224 = vst [vmem:[#allocation2] sm:$0xff] 0.0
          %225 = vst [vmem:[#allocation2 + $0x8] sm:$0xff] 0.0
          %226 = vst [vmem:[#allocation2 + $0x10] sm:$0xff] 0.0
        $region40: #{tpu_custom_call.1} parent=27 // pred_fallthru
          _
        %v227 = vld [vmem:[%s185] sm:$0xff]
        %v228 = vld [vmem:[%s185 + $0x8] sm:$0xff]
        %v229 = vld [vmem:[%s185 + $0x10] sm:$0xff]
        %v230 = vld [vmem:[%s194] sm:$0xff]
        %v231 = vld [vmem:[%s194 + $0x8] sm:$0xff]
        %v232 = vld [vmem:[%s194 + $0x10] sm:$0xff]
        %v233 = vsub.f32 %v227, %v230
        %v234 = vsub.f32 %v228, %v231
        %v235 = vsub.f32 %v229, %v232
        %v236 = vmul.f32 %v233, %v233
        %v237 = vadd.f32 %v236, 1e-06
        %v238 = vrsqrt.pop %v237
        %v239 = vmul.f32 %v237, %v238
        %vm240 = vcmp.eq.f32.partialorder %v237, inf
        %v241 = vsel %vm240, %v237, %v239
        %vm242 = vcmp.eq.f32.partialorder %v237, 0.0
        %v243 = vand.u32 %v237, 2147483648
        %v244 = vsel %vm242, %v243, %v241
        %v245 = vmul.f32 %v234, %v234
        %v246 = vadd.f32 %v245, 1e-06
        %v247 = vrsqrt.pop %v246
        %v248 = vmul.f32 %v246, %v247
        %vm249 = vcmp.eq.f32.partialorder %v246, inf
        %v250 = vsel %vm249, %v246, %v248
        %vm251 = vcmp.eq.f32.partialorder %v246, 0.0
        %v252 = vand.u32 %v246, 2147483648
        %v253 = vsel %vm251, %v252, %v250
        %v254 = vmul.f32 %v235, %v235
        %v255 = vadd.f32 %v254, 1e-06
        %v256 = vrsqrt.pop %v255
        %v257 = vmul.f32 %v255, %v256
        %vm258 = vcmp.eq.f32.partialorder %v255, inf
        %v259 = vsel %vm258, %v255, %v257
        %vm260 = vcmp.eq.f32.partialorder %v255, 0.0
        %v261 = vand.u32 %v255, 2147483648
        %v262 = vsel %vm260, %v261, %v259
        %v263 = vadd.f32 %v244, %v253
        %v264 = vadd.f32 %v263, %v262
        %v265 = vmul.f32 %v227, %v227
        %v266 = vmul.f32 %v228, %v228
        %v267 = vadd.f32 %v265, %v266
        %v268 = vrsqrt.pop %v267
        %v269 = vmul.f32 %v267, %v268
        %vm270 = vcmp.eq.f32.partialorder %v267, inf
        %v271 = vsel %vm270, %v267, %v269
        %vm272 = vcmp.eq.f32.partialorder %v267, 0.0
        %v273 = vand.u32 %v267, 2147483648
        %v274 = vsel %vm272, %v273, %v271
        %v275 = vadd.f32 %v274, 1e-08
        %v276 = vmul.f32 %v230, %v230
        %v277 = vmul.f32 %v231, %v231
        %v278 = vadd.f32 %v276, %v277
        %v279 = vrsqrt.pop %v278
        %v280 = vmul.f32 %v278, %v279
        %vm281 = vcmp.eq.f32.partialorder %v278, inf
        %v282 = vsel %vm281, %v278, %v280
        %vm283 = vcmp.eq.f32.partialorder %v278, 0.0
        %v284 = vand.u32 %v278, 2147483648
        %v285 = vsel %vm283, %v284, %v282
        %v286 = vadd.f32 %v285, 1e-08
        %v287 = vmul.f32 %v227, %v230
        %v288 = vmul.f32 %v228, %v231
        %v289 = vadd.f32 %v287, %v288
        %v290 = vmul.f32 %v275, %v286
        %v291 = vrcp.pop %v290
        %v292 = vmul.f32 %v289, %v291
        %v293 = vsub.f32 1.0, %v292
        %v294 = vlaneseq
        %v295 = vshrl.u32 %v294, 7
        %v296 = vlaneseq
        %v297 = vand.u32 %v296, 127
        %s298 = smul.u32 %s27, 8
        %v299 = vstv %s298
        %v300 = vadd.s32 %v299, %v295
        %v301 = vmul.u32 %v300, 128
        %v302 = vadd.s32 %v301, %v297
        %vm303 = vcmp.lt.s32.totalorder %v302, 256
        %v304 = vsel %vm303, %v264, 0.0
        %v305 = vsel %vm303, %v262, 0.0
        %v306 = vsel %vm303, %v293, 0.0
        %v307 = vld [vmem:[#allocation2] sm:$0xff]
        %v308 = vadd.f32 %v307, %v304
        %309 = vst [vmem:[#allocation2] sm:$0xff] %v308
        %s310 = scalar_lea.vmem [#allocation2], 8
        %v311 = vld [vmem:[%s310] sm:$0xff]
        %v312 = vadd.f32 %v311, %v305
        %313 = vst [vmem:[%s310] sm:$0xff] %v312
        %s314 = scalar_lea.vmem [#allocation2], 16
        %v315 = vld [vmem:[%s314] sm:$0xff]
        %v316 = vadd.f32 %v315, %v306
        %317 = vst [vmem:[%s314] sm:$0xff] %v316
        // Predicated region
        $region41: #{tpu_custom_call.1} parent=27 // pred_check
          %p318 = pneg %p220
        $region42: #{tpu_custom_call.1} parent=27 // pred_check_branch
          %320 = sbr.rel (%p318) target = $region44
        $region43: #{tpu_custom_call.1} parent=27 // pred_region
          %v321 = vld [vmem:[#allocation2] sm:$0xff]
          %v322 = vld [vmem:[#allocation2 + $0x8] sm:$0xff]
          %v323 = vld [vmem:[#allocation2 + $0x10] sm:$0xff]
          %324 = vadd.xlane.f32.xlu0 %v321
          %v325 = vpop.xlane.xlu0 %324
          %v326 = vrot.slane %v325, 4
          %v327 = vadd.f32 %v325, %v326
          %v328 = vrot.slane %v327, 2
          %v329 = vadd.f32 %v327, %v328
          %v330 = vrot.slane %v329, 1
          %v331 = vadd.f32 %v329, %v330
          %s332 = vtos %v331
          %333 = vadd.xlane.f32.xlu0 %v322
          %v334 = vpop.xlane.xlu0 %333
          %v335 = vrot.slane %v334, 4
          %v336 = vadd.f32 %v334, %v335
          %v337 = vrot.slane %v336, 2
          %v338 = vadd.f32 %v336, %v337
          %v339 = vrot.slane %v338, 1
          %v340 = vadd.f32 %v338, %v339
          %s341 = vtos %v340
          %342 = vadd.xlane.f32.xlu0 %v323
          %v343 = vpop.xlane.xlu0 %342
          %v344 = vrot.slane %v343, 4
          %v345 = vadd.f32 %v343, %v344
          %v346 = vrot.slane %v345, 2
          %v347 = vadd.f32 %v345, %v346
          %v348 = vrot.slane %v347, 1
          %v349 = vadd.f32 %v347, %v348
          %s350 = vtos %v349
          %vm351 = vcmp.eq.s32.totalorder %v295, 0
          %vm352 = vcmp.eq.s32.totalorder %v297, 0
          %vm353 = vmand %vm351, %vm352
          %vm354 = vcmp.eq.s32.totalorder %v297, 1
          %vm355 = vmand %vm351, %vm354
          %vm356 = vcmp.eq.s32.totalorder %v297, 2
          %vm357 = vmand %vm351, %vm356
          %v358 = vstv %s341
          %v359 = vsel %vm357, %v358, 0.0
          %v360 = vstv %s350
          %v361 = vsel %vm355, %v360, %v359
          %v362 = vstv %s332
          %v363 = vsel %vm353, %v362, %v361
          %364 = vst [vmem:[%s219] sm:$0xff] %v363
        $region44: #{tpu_custom_call.1} parent=27 // pred_fallthru
          _
        %s365 = sand.u32 %s98, 1
        %s366 = scalar_lea.sflag [#allocation5], %s365
        %s367 = sand.u32 %s98, 1
        %s368 = smul.addr %s367, 8
        %s369 = scalar_lea.vmem [#allocation8], %s368
        // Predicated region
        $region45: #{tpu_custom_call.1} parent=27 // pred_check
          %p370 = pneg %p108
        $region46: #{tpu_custom_call.1} parent=27 // pred_check_branch
          %372 = sbr.rel (%p370) target = $region48
        $region47: #{tpu_custom_call.1} parent=27 // pred_region
          %s374 = ssub.s32 128, 128
          %375 = vsyncadd %s366, %s374
          %s376 = smul.addr %s26, 128
          %s377 = scalar_lea.hbm %s2, %s376
          %s379 = sshll.u32 %s369, 4
          %s380 = int_to_ptr.vmem [resolvable:$true] %s379
          %382 = dma.vmem_to_hbm [thread:$0]  %s380, 128, %s377, %s366
        $region48: #{tpu_custom_call.1} parent=27 // pred_fallthru
          _
      $region28: #{tpu_custom_call.1} parent=5 // pred_fallthru
        _
      %p383 = scmp.le.s32.totalorder 2, %s17
      // Predicated region
      $region49: #{tpu_custom_call.1} parent=5 // pred_check
        %p384 = pneg %p383
      $region50: #{tpu_custom_call.1} parent=5 // pred_check_branch
        %386 = sbr.rel (%p384) target = $region52
      $region51: #{tpu_custom_call.1} parent=5 // pred_region
        %s387 = ssub.s32 %s17, 2
        // Predicated region
        $region53: #{tpu_custom_call.1} parent=51 // pred_check
          %p388 = pneg %p114
        $region54: #{tpu_custom_call.1} parent=51 // pred_check_branch
          %390 = sbr.rel (%p388) target = $region56
        $region55: #{tpu_custom_call.1} parent=51 // pred_region
          %s391 = sand.u32 %s99, 1
          %s392 = scalar_lea.sflag [#allocation5], %s391
          %s393 = sand.u32 %s99, 1
          %s394 = smul.addr %s393, 8
          %s395 = scalar_lea.vmem [#allocation8], %s394
          %396 = dma.done %s392, 128
        $region56: #{tpu_custom_call.1} parent=51 // pred_fallthru
          _
      $region52: #{tpu_custom_call.1} parent=5 // pred_fallthru
        _
    $region6: #{tpu_custom_call.1} parent=1 // loop_footer
      %s21 = sadd.s32 1, %s17
    $region7: #{tpu_custom_call.1} parent=1 // loop_footer_branch
      %16 = sbr.rel target = $region3
    $region8: #{tpu_custom_call.1} parent=1 // loop_exit
      _
    %397 = vsyncpa [#allocation4], 1
    %s398 = scalar_lea.sflag [#allocation4], 1
    %399 = vsyncpa %s398, 1
    %400 = vsyncpa [#allocation7], 1
    %s401 = scalar_lea.sflag [#allocation7], 1
    %402 = vsyncpa %s401, 1
    %403 = vsyncpa [#allocation5], 1
    %s404 = scalar_lea.sflag [#allocation5], 1
    %405 = vsyncpa %s404, 1

</llo_original>
